<compile_context>
chip_gen: v7x
topology: tpu7x:2x2x1
jax: 0.10.0
libtpu: 0.0.40
codegen_flags: <defaults>
</compile_context>

<pallas_src>
import functools

import jax
import jax.numpy as jnp
import numpy as np
from jax.experimental import pallas as pl
from jax.experimental.pallas import tpu as pltpu


def attention_unit_kernel(cnn_ref, kg_ref, wad_ref, w12_ref, b_ref, out_ref, *,
                          split_k: bool):
    cnn = cnn_ref[...].astype(jnp.float32)          # (Bt, D)
    kg = kg_ref[...].astype(jnp.float32)            # (Bt, D)
    D = cnn.shape[-1]

    # Attention logit difference: tanh(cnn + kg) @ (W_a[:,0] - W_a[:,1]).
    # One broadcast-mul (VALU) + one lane reduction (XLU) per tile.
    t = jnp.tanh(cnn + kg)                                          # (Bt, D)
    s = jnp.sum(t * wad_ref[...], axis=-1, keepdims=True)           # (Bt, 1)

    # softmax over 2 logits == sigmoid(s0 - s1); stable tanh form, single EUP op.
    a0 = 0.5 * (jnp.tanh(0.5 * s) + 1.0)                            # (Bt, 1)
    a1 = 1.0 - a0

    w_dtype = w12_ref.dtype
    c = (a0 * cnn).astype(w_dtype)                                  # (Bt, D)
    k = (a1 * kg).astype(w_dtype)                                   # (Bt, D)

    if split_k:
        # v5e: two native K=128 MXU passes over static sublane slices of W12,
        # avoids materializing the (Bt, 2D) concat temp.
        out = jnp.dot(c, w12_ref[:D, :], preferred_element_type=jnp.float32)
        out = out + jnp.dot(k, w12_ref[D:, :], preferred_element_type=jnp.float32)
    else:
        # v6e/v7x: single fused K=2D matmul (matches the 256-deep MXU).
        ck = jnp.concatenate([c, k], axis=-1)                       # (Bt, 2D)
        out = jnp.dot(ck, w12_ref[...], preferred_element_type=jnp.float32)

    out_ref[...] = (out + b_ref[...].astype(jnp.float32)).astype(out_ref.dtype)


def prepare_params(W_a, mlp_weight, mlp_bias, *, weight_dtype=None):
    """One-time (out of the hot path) conversion to kernel-ready layouts.

    weight_dtype=jnp.bfloat16 enables the bf16 matmul path (halves HBM bytes
    for W12 and uses single-pass bf16 MXU); accumulation stays f32.
    """
    W_a = jnp.asarray(W_a)
    wa_diff = (W_a[:, 0] - W_a[:, 1]).reshape(1, -1).astype(jnp.float32)  # (1, D)
    w12 = jnp.asarray(mlp_weight).T                                        # (2D, D)
    if weight_dtype is not None:
        w12 = w12.astype(weight_dtype)
    bias = jnp.asarray(mlp_bias).reshape(1, -1).astype(jnp.float32)        # (1, D)
    return wa_diff, w12, bias


def attention_unit_forward(drug_cnn, drug_kg, wa_diff, w12, bias, *,
                           block_b=2048, split_k=None):
    """drug_cnn, drug_kg: (B, D); wa_diff: (1, D); w12: (2D, D); bias: (1, D)."""
    B, D = drug_cnn.shape
    assert w12.shape == (2 * D, D)

    if split_k is None:
        # Static, trace-time choice: split the K dimension on v5e (4x128^2 MXU).
        kind = jax.devices()[0].device_kind.lower()
        split_k = "v5" in kind

    # Batch tile: multiple of 8 sublanes, capped at block_b and at the (rounded
    # up) batch so small batches don't over-allocate. No host-side padding:
    # Pallas masks the partial last block and OOB output rows are discarded.
    bb = min(block_b, ((B + 7) // 8) * 8)
    bb = max(8, (bb // 8) * 8)
    grid = (pl.cdiv(B, bb),)

    out_dtype = drug_cnn.dtype
    in_bytes = jnp.dtype(drug_cnn.dtype).itemsize
    w_bytes = jnp.dtype(w12.dtype).itemsize
    out_bytes = jnp.dtype(out_dtype).itemsize

    cost = pl.CostEstimate(
        flops=int(2 * B * (2 * D) * D + 6 * B * D),
        transcendentals=int(B * D + B),
        bytes_accessed=int((2 * B * D) * in_bytes + (B * D) * out_bytes
                           + (2 * D * D) * w_bytes + 2 * D * 4),
    )

    # VMEM footprint: 2 inputs x 2 bufs + 1 output x 2 bufs per tile + resident
    # weights. Only request an explicit scoped limit when we'd exceed the
    # smallest default (v5e: 16 MiB scoped), staying under v7x's 64 MiB phys.
    blk_elems = bb * D
    vmem_est = (2 * 2 * blk_elems * in_bytes + 2 * blk_elems * out_bytes
                + 2 * D * D * w_bytes + 2 * D * 4)
    cp_kwargs = dict(dimension_semantics=("parallel",))
    if vmem_est > 12 * 1024 * 1024:
        cp_kwargs["vmem_limit_bytes"] = int(min(vmem_est * 5 // 4,
                                                60 * 1024 * 1024))

    row_spec = pl.BlockSpec((bb, D), lambda i: (i, 0))
    # Weights / bias: constant index_map -> resident in VMEM across all steps.
    resident = lambda shape: pl.BlockSpec(shape, lambda i: (0, 0))

    out = pl.pallas_call(
        functools.partial(attention_unit_kernel, split_k=split_k),
        out_shape=jax.ShapeDtypeStruct((B, D), out_dtype),
        grid=grid,
        in_specs=[
            row_spec,                    # drug_cnn
            row_spec,                    # drug_kg
            resident((1, D)),            # wa_diff = W_a[:,0] - W_a[:,1]
            resident((2 * D, D)),        # W12 (stacked MLP weight, transposed)
            resident((1, D)),            # bias
        ],
        out_specs=row_spec,
        cost_estimate=cost,
        compiler_params=pltpu.CompilerParams(**cp_kwargs),
    )(drug_cnn, drug_kg, wa_diff, w12, bias)

    # module returns the same tensor twice
    return out, out


def reference_forward(drug_cnn, drug_kg, W_a, mlp_weight, mlp_bias):
    """Plain-JAX reference matching the PyTorch forward exactly."""
    f = drug_cnn + drug_kg
    logits = jnp.tanh(f) @ W_a                      # (B, 2)
    attn = jax.nn.softmax(logits, axis=-1)          # (B, 2)
    c = attn[:, 0:1] * drug_cnn
    k = attn[:, 1:2] * drug_kg
    feats = jnp.concatenate([c, k], axis=1)         # (B, 2D)
    out = feats @ mlp_weight.T + mlp_bias           # (B, D)
    return out, out


if __name__ == "__main__":
    # Match reference matmul precision to the kernel's f32 accumulation.
    jax.config.update("jax_default_matmul_precision", "highest")

    B, D = 8, 128  # small batch; D = module default input_dim (lane-dense)

    key = jax.random.PRNGKey(0)
    k_cnn, k_kg, k_wa, k_w, k_b = jax.random.split(key, 5)

    drug_cnn = jax.random.normal(k_cnn, (B, D), dtype=jnp.float32)
    drug_kg = jax.random.normal(k_kg, (B, D), dtype=jnp.float32)

    # deterministic parameter init (xavier_uniform for W_a; uniform for Linear)
    wa_bound = float(np.sqrt(6.0 / (D + 2)))
    W_a = jax.random.uniform(k_wa, (D, 2), minval=-wa_bound, maxval=wa_bound,
                             dtype=jnp.float32)
    lin_bound = float(1.0 / np.sqrt(2 * D))
    mlp_weight = jax.random.uniform(k_w, (D, 2 * D), minval=-lin_bound,
                                    maxval=lin_bound, dtype=jnp.float32)
    mlp_bias = jax.random.uniform(k_b, (D,), minval=-lin_bound, maxval=lin_bound,
                                  dtype=jnp.float32)

    # Hoist parameter prep out of the hot path; jit the forward wrapper.
    # For a bf16 I/O path pass weight_dtype=jnp.bfloat16 and bf16 inputs
    # (and relax the test tolerance accordingly).
    wa_diff, w12, bias = prepare_params(W_a, mlp_weight, mlp_bias)
    fwd = jax.jit(functools.partial(attention_unit_forward, block_b=2048))

    out_pallas, _ = fwd(drug_cnn, drug_kg, wa_diff, w12, bias)
    out_pallas = jax.block_until_ready(out_pallas)

    out_ref, _ = reference_forward(drug_cnn, drug_kg, W_a, mlp_weight, mlp_bias)
    out_ref = jax.block_until_ready(out_ref)

    np.testing.assert_allclose(np.asarray(out_pallas), np.asarray(out_ref),
                               rtol=1e-5, atol=1e-5)
    print("KERNEL_OK")
</pallas_src>

<mosaic_0001>
module attributes {stable_mosaic.version = 11 : i64} {
  func.func @attention_unit_kernel(%arg0: i32, %arg1: memref<8x128xf32, #tpu.memory_space<vmem>>, %arg2: memref<8x128xf32, #tpu.memory_space<vmem>>, %arg3: memref<1x128xf32, #tpu.memory_space<vmem>>, %arg4: memref<256x128xf32, #tpu.memory_space<vmem>>, %arg5: memref<1x128xf32, #tpu.memory_space<vmem>>, %arg6: memref<8x128xf32, #tpu.memory_space<vmem>>) attributes {dimension_semantics = [#tpu.dimension_semantics<parallel>], iteration_bounds = array<i64: 1>, scalar_prefetch = 0 : i64, scratch_operands = 0 : i64, tpu.core_type = #tpu.core_type<tc>, window_params = [{transform_indices = @transform_0, window_bounds = array<i64: 8, 128>}, {transform_indices = @transform_1, window_bounds = array<i64: 8, 128>}, {pipeline_mode = #tpu.pipeline_mode<synchronous>, transform_indices = @transform_2, window_bounds = array<i64: 1, 128>}, {pipeline_mode = #tpu.pipeline_mode<synchronous>, transform_indices = @transform_3, window_bounds = array<i64: 256, 128>}, {pipeline_mode = #tpu.pipeline_mode<synchronous>, transform_indices = @transform_4, window_bounds = array<i64: 1, 128>}, {transform_indices = @transform_5, window_bounds = array<i64: 8, 128>}]} {
    %c0 = arith.constant 0 : index
    %c0_0 = arith.constant 0 : index
    %0 = vector.load %arg1[%c0, %c0_0] : memref<8x128xf32, #tpu.memory_space<vmem>>, vector<8x128xf32>
    %c0_1 = arith.constant 0 : index
    %c0_2 = arith.constant 0 : index
    %1 = vector.load %arg2[%c0_1, %c0_2] : memref<8x128xf32, #tpu.memory_space<vmem>>, vector<8x128xf32>
    %2 = arith.addf %0, %1 : vector<8x128xf32>
    %3 = math.tanh %2 : vector<8x128xf32>
    %c0_3 = arith.constant 0 : index
    %c0_4 = arith.constant 0 : index
    %4 = vector.load %arg3[%c0_3, %c0_4] : memref<1x128xf32, #tpu.memory_space<vmem>>, vector<1x128xf32>
    %5 = vector.broadcast %4 : vector<1x128xf32> to vector<8x128xf32>
    %6 = arith.mulf %3, %5 : vector<8x128xf32>
    %cst = arith.constant dense<0.000000e+00> : vector<8xf32>
    %7 = vector.multi_reduction <add>, %6, %cst [1] : vector<8x128xf32> to vector<8xf32>
    %8 = vector.shape_cast %7 : vector<8xf32> to vector<8x1xf32>
    %cst_5 = arith.constant 5.000000e-01 : f32
    %9 = vector.broadcast %cst_5 : f32 to vector<8x1xf32>
    %10 = arith.mulf %9, %8 : vector<8x1xf32>
    %11 = math.tanh %10 : vector<8x1xf32>
    %cst_6 = arith.constant 1.000000e+00 : f32
    %12 = vector.broadcast %cst_6 : f32 to vector<8x1xf32>
    %13 = arith.addf %11, %12 : vector<8x1xf32>
    %cst_7 = arith.constant 5.000000e-01 : f32
    %14 = vector.broadcast %cst_7 : f32 to vector<8x1xf32>
    %15 = arith.mulf %14, %13 : vector<8x1xf32>
    %cst_8 = arith.constant 1.000000e+00 : f32
    %16 = vector.broadcast %cst_8 : f32 to vector<8x1xf32>
    %17 = arith.subf %16, %15 : vector<8x1xf32>
    %18 = vector.broadcast %15 : vector<8x1xf32> to vector<8x128xf32>
    %19 = arith.mulf %18, %0 : vector<8x128xf32>
    %20 = vector.broadcast %17 : vector<8x1xf32> to vector<8x128xf32>
    %21 = arith.mulf %20, %1 : vector<8x128xf32>
    %22 = tpu.concatenate %19, %21 in 1 : vector<8x128xf32>, vector<8x128xf32> -> vector<8x256xf32>
    %c0_9 = arith.constant 0 : index
    %c0_10 = arith.constant 0 : index
    %23 = vector.load %arg4[%c0_9, %c0_10] : memref<256x128xf32, #tpu.memory_space<vmem>>, vector<256x128xf32>
    %cst_11 = arith.constant dense<0.000000e+00> : vector<8x128xf32>
    %24 = tpu.matmul %22, %23, %cst_11 {dimension_numbers = #tpu.dot_dimension_numbers<[1], [0], [0], [1], [0, 0, 1, 1], [], []>, precision = #tpu.contract_precision<fp32>} : vector<8x256xf32>, vector<256x128xf32>, vector<8x128xf32> -> vector<8x128xf32>
    %c0_12 = arith.constant 0 : index
    %c0_13 = arith.constant 0 : index
    %25 = vector.load %arg5[%c0_12, %c0_13] : memref<1x128xf32, #tpu.memory_space<vmem>>, vector<1x128xf32>
    %26 = vector.broadcast %25 : vector<1x128xf32> to vector<8x128xf32>
    %27 = arith.addf %24, %26 : vector<8x128xf32>
    %c0_14 = arith.constant 0 : index
    %c0_15 = arith.constant 0 : index
    %28 = vector.load %arg6[%c0_14, %c0_15] : memref<8x128xf32, #tpu.memory_space<vmem>>, vector<8x128xf32>
    tpu.vector_store %arg6[%c0_14, %c0_15], %27 {strides = array<i32>} : memref<8x128xf32, #tpu.memory_space<vmem>>, vector<8x128xf32>,
    return
  }
  func.func @transform_0(%arg0: i32) -> (i32, i32) {
    %c0_i32 = arith.constant 0 : i32
    %c0_i32_0 = arith.constant 0 : i32
    return %arg0, %c0_i32 : i32, i32
  }
  func.func @transform_1(%arg0: i32) -> (i32, i32) {
    %c0_i32 = arith.constant 0 : i32
    %c0_i32_0 = arith.constant 0 : i32
    return %arg0, %c0_i32 : i32, i32
  }
  func.func @transform_2(%arg0: i32) -> (i32, i32) {
    %c0_i32 = arith.constant 0 : i32
    %c0_i32_0 = arith.constant 0 : i32
    %c0_i32_1 = arith.constant 0 : i32
    return %c0_i32, %c0_i32_0 : i32, i32
  }
  func.func @transform_3(%arg0: i32) -> (i32, i32) {
    %c0_i32 = arith.constant 0 : i32
    %c0_i32_0 = arith.constant 0 : i32
    %c0_i32_1 = arith.constant 0 : i32
    return %c0_i32, %c0_i32_0 : i32, i32
  }
  func.func @transform_4(%arg0: i32) -> (i32, i32) {
    %c0_i32 = arith.constant 0 : i32
    %c0_i32_0 = arith.constant 0 : i32
    %c0_i32_1 = arith.constant 0 : i32
    return %c0_i32, %c0_i32_0 : i32, i32
  }
  func.func @transform_5(%arg0: i32) -> (i32, i32) {
    %c0_i32 = arith.constant 0 : i32
    %c0_i32_0 = arith.constant 0 : i32
    return %arg0, %c0_i32 : i32, i32
  }
}

</mosaic_0001>

<llo_original>
// kernel: attention_unit_forward.1
$region0: #{attention_unit_forward.1}
  #allocation0 [shape = 'u32[]', space=smem, size = 0x4, offset = 0x4, fixed_abs, tag = 'smem constant byte address 0x4 - core index']
  #allocation1 [shape = 'u32[144,128]{1,0:T(1,128)}', space=vmem, size = 0x12000, scoped, tag = 'internal scratch']
  %s0 = inlined_call_operand.hbm [shape: f32[8,128], index: 0, kind: input, shape index: {}]
  %s1 = inlined_call_operand.hbm [shape: f32[8,128], index: 1, kind: input, shape index: {}]
  %s2 = inlined_call_operand.vmem [shape: f32[1,128], index: 2, kind: input, shape index: {}]
  %s3 = inlined_call_operand.hbm [shape: f32[256,128], index: 3, kind: input, shape index: {}]
  %s4 = inlined_call_operand.vmem [shape: f32[1,128], index: 4, kind: input, shape index: {}]
  %s5 = inlined_call_operand.vmem [shape: f32[8,128], index: 5, kind: output, shape index: {}]
  %s6 = sld [smem:[#allocation0]]
  $region42: #{attention_unit_forward.1} parent=0
    _
  %s8 = ssub.s32 1, %s6
  %s9 = scalar_select 0, %s8, %s6
  $region1: #{attention_unit_forward.1} parent=0
    #allocation2 [shape = 'u8[4096]{0}', space=vmem, size = 0x1000, scoped, tag = 'input window, operand 0, single buffered']
    #allocation3 [shape = 's32[1]{0}', space=sflag, size = 0x4, scoped, tag = 'scoped memory for attention_unit_forward.1']
    #allocation4 [shape = 'u8[4096]{0}', space=vmem, size = 0x1000, scoped, tag = 'input window, operand 1, single buffered']
    #allocation5 [shape = 's32[1]{0}', space=sflag, size = 0x4, scoped, tag = 'scoped memory for attention_unit_forward.1']
    #allocation6 [shape = 'u8[131072]{0}', space=vmem, size = 0x20000, scoped, tag = 'input window, operand 3, single buffered']
    %10 = vsyncpa [#allocation3], 0
    %11 = vsyncpa [#allocation5], 0
    // Predicated region
    $region2: #{attention_unit_forward.1} parent=1 // pred_check
      _
    $region3: #{attention_unit_forward.1} parent=1 // pred_check_branch
      %13 = sbr.rel (0) target = $region5
    $region4: #{attention_unit_forward.1} parent=1 // pred_region
      %s15 = ssub.s32 128, 128
      %16 = vsyncadd [#allocation3], %s15
      %s18 = sshll.u32 [#allocation2], 4
      %s19 = int_to_ptr.vmem [resolvable:$true] %s18
      %21 = dma.hbm_to_vmem [thread:$0]  %s0, 128, %s19, [#allocation3]
    $region5: #{attention_unit_forward.1} parent=1 // pred_fallthru
      _
    // Predicated region
    $region6: #{attention_unit_forward.1} parent=1 // pred_check
      _
    $region7: #{attention_unit_forward.1} parent=1 // pred_check_branch
      %23 = sbr.rel (0) target = $region9
    $region8: #{attention_unit_forward.1} parent=1 // pred_region
      %s25 = ssub.s32 128, 128
      %26 = vsyncadd [#allocation5], %s25
      %s28 = sshll.u32 [#allocation4], 4
      %s29 = int_to_ptr.vmem [resolvable:$true] %s28
      %31 = dma.hbm_to_vmem [thread:$0]  %s1, 128, %s29, [#allocation5]
    $region9: #{attention_unit_forward.1} parent=1 // pred_fallthru
      _
    // Predicated region
    $region10: #{attention_unit_forward.1} parent=1 // pred_check
      _
    $region11: #{attention_unit_forward.1} parent=1 // pred_check_branch
      %33 = sbr.rel (0) target = $region13
    $region12: #{attention_unit_forward.1} parent=1 // pred_region
      _
    $region13: #{attention_unit_forward.1} parent=1 // pred_fallthru
      _
    // Predicated region
    $region14: #{attention_unit_forward.1} parent=1 // pred_check
      _
    $region15: #{attention_unit_forward.1} parent=1 // pred_check_branch
      %35 = sbr.rel (0) target = $region17
    $region16: #{attention_unit_forward.1} parent=1 // pred_region
      %s37 = ssub.s32 4096, 4096
      %38 = vsyncadd [#allocation5], %s37
      %s39 = sshll.u32 [#allocation6], 4
      %s40 = int_to_ptr.vmem [resolvable:$true] %s39
      %45 = dma.hbm_to_vmem [thread:$0]  %s3, 4096, %s40, [#allocation5], 128, 128, 8
    $region17: #{attention_unit_forward.1} parent=1 // pred_fallthru
      _
    // Predicated region
    $region18: #{attention_unit_forward.1} parent=1 // pred_check
      _
    $region19: #{attention_unit_forward.1} parent=1 // pred_check_branch
      %47 = sbr.rel (0) target = $region21
    $region20: #{attention_unit_forward.1} parent=1 // pred_region
      _
    $region21: #{attention_unit_forward.1} parent=1 // pred_fallthru
      _
    // Predicated region
    $region22: #{attention_unit_forward.1} parent=1 // pred_check
      _
    $region23: #{attention_unit_forward.1} parent=1 // pred_check_branch
      %49 = sbr.rel (0) target = $region25
    $region24: #{attention_unit_forward.1} parent=1 // pred_region
      %50 = dma.done [#allocation3], 128
    $region25: #{attention_unit_forward.1} parent=1 // pred_fallthru
      _
    // Predicated region
    $region26: #{attention_unit_forward.1} parent=1 // pred_check
      _
    $region27: #{attention_unit_forward.1} parent=1 // pred_check_branch
      %52 = sbr.rel (0) target = $region29
    $region28: #{attention_unit_forward.1} parent=1 // pred_region
      %53 = dma.done [#allocation5], 128
    $region29: #{attention_unit_forward.1} parent=1 // pred_fallthru
      _
    // Predicated region
    $region30: #{attention_unit_forward.1} parent=1 // pred_check
      _
    $region31: #{attention_unit_forward.1} parent=1 // pred_check_branch
      %55 = sbr.rel (0) target = $region33
    $region32: #{attention_unit_forward.1} parent=1 // pred_region
      %56 = dma.done [#allocation5], 4096
    $region33: #{attention_unit_forward.1} parent=1 // pred_fallthru
      _
    %v57 = vld [vmem:[#allocation2] sm:$0xff]
    %v58 = vld [vmem:[#allocation4] sm:$0xff]
    %v59 = vadd.f32 %v57, %v58
    %v60 = vtanh.pop %v59
    %v61 = vld [vmem:[%s2] sm:$0x1]
    %v63 = vlaneseq
    %v64 = vshrl.u32 %v63, 7
    %v65 = vsub.s32 0, %v64
    %v66 = vrot.slane %v61, %v65
    %v68 = vmul.f32 %v60, %v66
    %69 = vadd.xlane.f32.xlu0 %v68
    %v70 = vpop.xlane.xlu0 %69
    %v71 = vmul.f32 %v70, 0.5
    %v72 = vtanh.pop %v71
    %v73 = vadd.f32 %v72, 1.0
    %v74 = vmul.f32 %v73, 0.5
    %v75 = vsub.f32 1.0, %v74
    %v76 = vmul.f32 %v74, %v57
    %v77 = vmul.f32 %v75, %v58
    %v78 = vld [vmem:[#allocation6] sm:$0xff]
    %v79 = vld [vmem:[#allocation6 + $0x8] sm:$0xff]
    %v80 = vld [vmem:[#allocation6 + $0x10] sm:$0xff]
    %v81 = vld [vmem:[#allocation6 + $0x18] sm:$0xff]
    %v82 = vld [vmem:[#allocation6 + $0x20] sm:$0xff]
    %v83 = vld [vmem:[#allocation6 + $0x28] sm:$0xff]
    %v84 = vld [vmem:[#allocation6 + $0x30] sm:$0xff]
    %v85 = vld [vmem:[#allocation6 + $0x38] sm:$0xff]
    %v86 = vld [vmem:[#allocation6 + $0x40] sm:$0xff]
    %v87 = vld [vmem:[#allocation6 + $0x48] sm:$0xff]
    %v88 = vld [vmem:[#allocation6 + $0x50] sm:$0xff]
    %v89 = vld [vmem:[#allocation6 + $0x58] sm:$0xff]
    %v90 = vld [vmem:[#allocation6 + $0x60] sm:$0xff]
    %v91 = vld [vmem:[#allocation6 + $0x68] sm:$0xff]
    %v92 = vld [vmem:[#allocation6 + $0x70] sm:$0xff]
    %v93 = vld [vmem:[#allocation6 + $0x78] sm:$0xff]
    %v94 = vld [vmem:[#allocation6 + $0x80] sm:$0xff]
    %v95 = vld [vmem:[#allocation6 + $0x88] sm:$0xff]
    %v96 = vld [vmem:[#allocation6 + $0x90] sm:$0xff]
    %v97 = vld [vmem:[#allocation6 + $0x98] sm:$0xff]
    %v98 = vld [vmem:[#allocation6 + $0xa0] sm:$0xff]
    %v99 = vld [vmem:[#allocation6 + $0xa8] sm:$0xff]
    %v100 = vld [vmem:[#allocation6 + $0xb0] sm:$0xff]
    %v101 = vld [vmem:[#allocation6 + $0xb8] sm:$0xff]
    %v102 = vld [vmem:[#allocation6 + $0xc0] sm:$0xff]
    %v103 = vld [vmem:[#allocation6 + $0xc8] sm:$0xff]
    %v104 = vld [vmem:[#allocation6 + $0xd0] sm:$0xff]
    %v105 = vld [vmem:[#allocation6 + $0xd8] sm:$0xff]
    %v106 = vld [vmem:[#allocation6 + $0xe0] sm:$0xff]
    %v107 = vld [vmem:[#allocation6 + $0xe8] sm:$0xff]
    %v108 = vld [vmem:[#allocation6 + $0xf0] sm:$0xff]
    %v109 = vld [vmem:[#allocation6 + $0xf8] sm:$0xff]
    %v110 = vld [vmem:[%s4] sm:$0x1]
    %v112 = vlaneseq
    %v113 = vshrl.u32 %v112, 7
    %v114 = vsub.s32 0, %v113
    %v115 = vrot.slane %v110, %v114
    %117 = vmatprep.subr.mxu0 0.0
    %v118 = vand.u32 %v78, 4294901760
    %119 = vmatpush1.msra.mxu0 %v118
    %120 = vmatprep.subr.mxu0 0.0
    %v121 = vand.u32 %v79, 4294901760
    %122 = vmatpush1.msra.mxu0 %v121
    %123 = vmatprep.subr.mxu0 0.0
    %v124 = vand.u32 %v80, 4294901760
    %125 = vmatpush1.msra.mxu0 %v124
    %126 = vmatprep.subr.mxu0 0.0
    %v127 = vand.u32 %v81, 4294901760
    %128 = vmatpush1.msra.mxu0 %v127
    %129 = vmatprep.subr.mxu0 0.0
    %v130 = vand.u32 %v82, 4294901760
    %131 = vmatpush1.msra.mxu0 %v130
    %132 = vmatprep.subr.mxu0 0.0
    %v133 = vand.u32 %v83, 4294901760
    %134 = vmatpush1.msra.mxu0 %v133
    %135 = vmatprep.subr.mxu0 0.0
    %v136 = vand.u32 %v84, 4294901760
    %137 = vmatpush1.msra.mxu0 %v136
    %138 = vmatprep.subr.mxu0 0.0
    %v139 = vand.u32 %v85, 4294901760
    %140 = vmatpush1.msra.mxu0 %v139
    %141 = vmatprep.subr.mxu0 0.0
    %v142 = vand.u32 %v86, 4294901760
    %143 = vmatpush1.msra.mxu0 %v142
    %144 = vmatprep.subr.mxu0 0.0
    %v145 = vand.u32 %v87, 4294901760
    %146 = vmatpush1.msra.mxu0 %v145
    %147 = vmatprep.subr.mxu0 0.0
    %v148 = vand.u32 %v88, 4294901760
    %149 = vmatpush1.msra.mxu0 %v148
    %150 = vmatprep.subr.mxu0 0.0
    %v151 = vand.u32 %v89, 4294901760
    %152 = vmatpush1.msra.mxu0 %v151
    %153 = vmatprep.subr.mxu0 0.0
    %v154 = vand.u32 %v90, 4294901760
    %155 = vmatpush1.msra.mxu0 %v154
    %156 = vmatprep.subr.mxu0 0.0
    %v157 = vand.u32 %v91, 4294901760
    %158 = vmatpush1.msra.mxu0 %v157
    %159 = vmatprep.subr.mxu0 0.0
    %v160 = vand.u32 %v92, 4294901760
    %161 = vmatpush1.msra.mxu0 %v160
    %162 = vmatprep.subr.mxu0 0.0
    %v163 = vand.u32 %v93, 4294901760
    %164 = vmatpush1.msra.mxu0 %v163
    %165 = vmatprep.subr.mxu0 0.0
    %v166 = vand.u32 %v94, 4294901760
    %167 = vmatpush1.msra.mxu0 %v166
    %168 = vmatprep.subr.mxu0 0.0
    %v169 = vand.u32 %v95, 4294901760
    %170 = vmatpush1.msra.mxu0 %v169
    %171 = vmatprep.subr.mxu0 0.0
    %v172 = vand.u32 %v96, 4294901760
    %173 = vmatpush1.msra.mxu0 %v172
    %174 = vmatprep.subr.mxu0 0.0
    %v175 = vand.u32 %v97, 4294901760
    %176 = vmatpush1.msra.mxu0 %v175
    %177 = vmatprep.subr.mxu0 0.0
    %v178 = vand.u32 %v98, 4294901760
    %179 = vmatpush1.msra.mxu0 %v178
    %180 = vmatprep.subr.mxu0 0.0
    %v181 = vand.u32 %v99, 4294901760
    %182 = vmatpush1.msra.mxu0 %v181
    %183 = vmatprep.subr.mxu0 0.0
    %v184 = vand.u32 %v100, 4294901760
    %185 = vmatpush1.msra.mxu0 %v184
    %186 = vmatprep.subr.mxu0 0.0
    %v187 = vand.u32 %v101, 4294901760
    %188 = vmatpush1.msra.mxu0 %v187
    %189 = vmatprep.subr.mxu0 0.0
    %v190 = vand.u32 %v102, 4294901760
    %191 = vmatpush1.msra.mxu0 %v190
    %192 = vmatprep.subr.mxu0 0.0
    %v193 = vand.u32 %v103, 4294901760
    %194 = vmatpush1.msra.mxu0 %v193
    %195 = vmatprep.subr.mxu0 0.0
    %v196 = vand.u32 %v104, 4294901760
    %197 = vmatpush1.msra.mxu0 %v196
    %198 = vmatprep.subr.mxu0 0.0
    %v199 = vand.u32 %v105, 4294901760
    %200 = vmatpush1.msra.mxu0 %v199
    %201 = vmatprep.subr.mxu0 0.0
    %v202 = vand.u32 %v106, 4294901760
    %203 = vmatpush1.msra.mxu0 %v202
    %204 = vmatprep.subr.mxu0 0.0
    %v205 = vand.u32 %v107, 4294901760
    %206 = vmatpush1.msra.mxu0 %v205
    %207 = vmatprep.subr.mxu0 0.0
    %v208 = vand.u32 %v108, 4294901760
    %209 = vmatpush1.msra.mxu0 %v208
    %210 = vmatprep.subr.mxu0 0.0
    %v211 = vand.u32 %v109, 4294901760
    %212 = vmatpush1.msra.mxu0 %v211
    %v213 = vand.u32 %v77, 4294901760
    %v214 = vsub.f32 %v77, %v213
    %v215 = vand.u32 %v214, 4294901760
    %v216 = vsub.f32 %v214, %v215
    %v217 = vand.u32 %v216, 4294901760
    %218 = vmatprep.mubr.f32.mxu0 %v217
    %v219 = vand.u32 %v76, 4294901760
    %v220 = vsub.f32 %v76, %v219
    %v221 = vand.u32 %v220, 4294901760
    %v222 = vsub.f32 %v220, %v221
    %v223 = vand.u32 %v222, 4294901760
    %224 = vmatmul.mubr.f32.gmra.mrb[0].mxu0 %v223
    %v225 = vpop.f32.mrb[0].mxu0
    %v226 = vadd.f32 %v115, %v225
    %v227 = vpop.f32.mrb[0].mxu0
    %228 = vdwg.mxu0
    %229 = vmatprep.subr.mxu0 0.0
    %v230 = vand.u32 %v78, 4294901760
    %v231 = vsub.f32 %v78, %v230
    %v232 = vand.u32 %v231, 4294901760
    %v233 = vsub.f32 %v231, %v232
    %v234 = vand.u32 %v233, 4294901760
    %235 = vmatpush1.msra.mxu0 %v234
    %236 = vmatprep.subr.mxu0 0.0
    %v237 = vand.u32 %v79, 4294901760
    %v238 = vsub.f32 %v79, %v237
    %v239 = vand.u32 %v238, 4294901760
    %v240 = vsub.f32 %v238, %v239
    %v241 = vand.u32 %v240, 4294901760
    %242 = vmatpush1.msra.mxu0 %v241
    %243 = vmatprep.subr.mxu0 0.0
    %v244 = vand.u32 %v80, 4294901760
    %v245 = vsub.f32 %v80, %v244
    %v246 = vand.u32 %v245, 4294901760
    %v247 = vsub.f32 %v245, %v246
    %v248 = vand.u32 %v247, 4294901760
    %249 = vmatpush1.msra.mxu0 %v248
    %250 = vmatprep.subr.mxu0 0.0
    %v251 = vand.u32 %v81, 4294901760
    %v252 = vsub.f32 %v81, %v251
    %v253 = vand.u32 %v252, 4294901760
    %v254 = vsub.f32 %v252, %v253
    %v255 = vand.u32 %v254, 4294901760
    %256 = vmatpush1.msra.mxu0 %v255
    %257 = vmatprep.subr.mxu0 0.0
    %v258 = vand.u32 %v82, 4294901760
    %v259 = vsub.f32 %v82, %v258
    %v260 = vand.u32 %v259, 4294901760
    %v261 = vsub.f32 %v259, %v260
    %v262 = vand.u32 %v261, 4294901760
    %263 = vmatpush1.msra.mxu0 %v262
    %264 = vmatprep.subr.mxu0 0.0
    %v265 = vand.u32 %v83, 4294901760
    %v266 = vsub.f32 %v83, %v265
    %v267 = vand.u32 %v266, 4294901760
    %v268 = vsub.f32 %v266, %v267
    %v269 = vand.u32 %v268, 4294901760
    %270 = vmatpush1.msra.mxu0 %v269
    %271 = vmatprep.subr.mxu0 0.0
    %v272 = vand.u32 %v84, 4294901760
    %v273 = vsub.f32 %v84, %v272
    %v274 = vand.u32 %v273, 4294901760
    %v275 = vsub.f32 %v273, %v274
    %v276 = vand.u32 %v275, 4294901760
    %277 = vmatpush1.msra.mxu0 %v276
    %278 = vmatprep.subr.mxu0 0.0
    %v279 = vand.u32 %v85, 4294901760
    %v280 = vsub.f32 %v85, %v279
    %v281 = vand.u32 %v280, 4294901760
    %v282 = vsub.f32 %v280, %v281
    %v283 = vand.u32 %v282, 4294901760
    %284 = vmatpush1.msra.mxu0 %v283
    %285 = vmatprep.subr.mxu0 0.0
    %v286 = vand.u32 %v86, 4294901760
    %v287 = vsub.f32 %v86, %v286
    %v288 = vand.u32 %v287, 4294901760
    %v289 = vsub.f32 %v287, %v288
    %v290 = vand.u32 %v289, 4294901760
    %291 = vmatpush1.msra.mxu0 %v290
    %292 = vmatprep.subr.mxu0 0.0
    %v293 = vand.u32 %v87, 4294901760
    %v294 = vsub.f32 %v87, %v293
    %v295 = vand.u32 %v294, 4294901760
    %v296 = vsub.f32 %v294, %v295
    %v297 = vand.u32 %v296, 4294901760
    %298 = vmatpush1.msra.mxu0 %v297
    %299 = vmatprep.subr.mxu0 0.0
    %v300 = vand.u32 %v88, 4294901760
    %v301 = vsub.f32 %v88, %v300
    %v302 = vand.u32 %v301, 4294901760
    %v303 = vsub.f32 %v301, %v302
    %v304 = vand.u32 %v303, 4294901760
    %305 = vmatpush1.msra.mxu0 %v304
    %306 = vmatprep.subr.mxu0 0.0
    %v307 = vand.u32 %v89, 4294901760
    %v308 = vsub.f32 %v89, %v307
    %v309 = vand.u32 %v308, 4294901760
    %v310 = vsub.f32 %v308, %v309
    %v311 = vand.u32 %v310, 4294901760
    %312 = vmatpush1.msra.mxu0 %v311
    %313 = vmatprep.subr.mxu0 0.0
    %v314 = vand.u32 %v90, 4294901760
    %v315 = vsub.f32 %v90, %v314
    %v316 = vand.u32 %v315, 4294901760
    %v317 = vsub.f32 %v315, %v316
    %v318 = vand.u32 %v317, 4294901760
    %319 = vmatpush1.msra.mxu0 %v318
    %320 = vmatprep.subr.mxu0 0.0
    %v321 = vand.u32 %v91, 4294901760
    %v322 = vsub.f32 %v91, %v321
    %v323 = vand.u32 %v322, 4294901760
    %v324 = vsub.f32 %v322, %v323
    %v325 = vand.u32 %v324, 4294901760
    %326 = vmatpush1.msra.mxu0 %v325
    %327 = vmatprep.subr.mxu0 0.0
    %v328 = vand.u32 %v92, 4294901760
    %v329 = vsub.f32 %v92, %v328
    %v330 = vand.u32 %v329, 4294901760
    %v331 = vsub.f32 %v329, %v330
    %v332 = vand.u32 %v331, 4294901760
    %333 = vmatpush1.msra.mxu0 %v332
    %334 = vmatprep.subr.mxu0 0.0
    %v335 = vand.u32 %v93, 4294901760
    %v336 = vsub.f32 %v93, %v335
    %v337 = vand.u32 %v336, 4294901760
    %v338 = vsub.f32 %v336, %v337
    %v339 = vand.u32 %v338, 4294901760
    %340 = vmatpush1.msra.mxu0 %v339
    %341 = vmatprep.subr.mxu0 0.0
    %v342 = vand.u32 %v94, 4294901760
    %v343 = vsub.f32 %v94, %v342
    %v344 = vand.u32 %v343, 4294901760
    %v345 = vsub.f32 %v343, %v344
    %v346 = vand.u32 %v345, 4294901760
    %347 = vmatpush1.msra.mxu0 %v346
    %348 = vmatprep.subr.mxu0 0.0
    %v349 = vand.u32 %v95, 4294901760
    %v350 = vsub.f32 %v95, %v349
    %v351 = vand.u32 %v350, 4294901760
    %v352 = vsub.f32 %v350, %v351
    %v353 = vand.u32 %v352, 4294901760
    %354 = vmatpush1.msra.mxu0 %v353
    %355 = vmatprep.subr.mxu0 0.0
    %v356 = vand.u32 %v96, 4294901760
    %v357 = vsub.f32 %v96, %v356
    %v358 = vand.u32 %v357, 4294901760
    %v359 = vsub.f32 %v357, %v358
    %v360 = vand.u32 %v359, 4294901760
    %361 = vmatpush1.msra.mxu0 %v360
    %362 = vmatprep.subr.mxu0 0.0
    %v363 = vand.u32 %v97, 4294901760
    %v364 = vsub.f32 %v97, %v363
    %v365 = vand.u32 %v364, 4294901760
    %v366 = vsub.f32 %v364, %v365
    %v367 = vand.u32 %v366, 4294901760
    %368 = vmatpush1.msra.mxu0 %v367
    %369 = vmatprep.subr.mxu0 0.0
    %v370 = vand.u32 %v98, 4294901760
    %v371 = vsub.f32 %v98, %v370
    %v372 = vand.u32 %v371, 4294901760
    %v373 = vsub.f32 %v371, %v372
    %v374 = vand.u32 %v373, 4294901760
    %375 = vmatpush1.msra.mxu0 %v374
    %376 = vmatprep.subr.mxu0 0.0
    %v377 = vand.u32 %v99, 4294901760
    %v378 = vsub.f32 %v99, %v377
    %v379 = vand.u32 %v378, 4294901760
    %v380 = vsub.f32 %v378, %v379
    %v381 = vand.u32 %v380, 4294901760
    %382 = vmatpush1.msra.mxu0 %v381
    %383 = vmatprep.subr.mxu0 0.0
    %v384 = vand.u32 %v100, 4294901760
    %v385 = vsub.f32 %v100, %v384
    %v386 = vand.u32 %v385, 4294901760
    %v387 = vsub.f32 %v385, %v386
    %v388 = vand.u32 %v387, 4294901760
    %389 = vmatpush1.msra.mxu0 %v388
    %390 = vmatprep.subr.mxu0 0.0
    %v391 = vand.u32 %v101, 4294901760
    %v392 = vsub.f32 %v101, %v391
    %v393 = vand.u32 %v392, 4294901760
    %v394 = vsub.f32 %v392, %v393
    %v395 = vand.u32 %v394, 4294901760
    %396 = vmatpush1.msra.mxu0 %v395
    %397 = vmatprep.subr.mxu0 0.0
    %v398 = vand.u32 %v102, 4294901760
    %v399 = vsub.f32 %v102, %v398
    %v400 = vand.u32 %v399, 4294901760
    %v401 = vsub.f32 %v399, %v400
    %v402 = vand.u32 %v401, 4294901760
    %403 = vmatpush1.msra.mxu0 %v402
    %404 = vmatprep.subr.mxu0 0.0
    %v405 = vand.u32 %v103, 4294901760
    %v406 = vsub.f32 %v103, %v405
    %v407 = vand.u32 %v406, 4294901760
    %v408 = vsub.f32 %v406, %v407
    %v409 = vand.u32 %v408, 4294901760
    %410 = vmatpush1.msra.mxu0 %v409
    %411 = vmatprep.subr.mxu0 0.0
    %v412 = vand.u32 %v104, 4294901760
    %v413 = vsub.f32 %v104, %v412
    %v414 = vand.u32 %v413, 4294901760
    %v415 = vsub.f32 %v413, %v414
    %v416 = vand.u32 %v415, 4294901760
    %417 = vmatpush1.msra.mxu0 %v416
    %418 = vmatprep.subr.mxu0 0.0
    %v419 = vand.u32 %v105, 4294901760
    %v420 = vsub.f32 %v105, %v419
    %v421 = vand.u32 %v420, 4294901760
    %v422 = vsub.f32 %v420, %v421
    %v423 = vand.u32 %v422, 4294901760
    %424 = vmatpush1.msra.mxu0 %v423
    %425 = vmatprep.subr.mxu0 0.0
    %v426 = vand.u32 %v106, 4294901760
    %v427 = vsub.f32 %v106, %v426
    %v428 = vand.u32 %v427, 4294901760
    %v429 = vsub.f32 %v427, %v428
    %v430 = vand.u32 %v429, 4294901760
    %431 = vmatpush1.msra.mxu0 %v430
    %432 = vmatprep.subr.mxu0 0.0
    %v433 = vand.u32 %v107, 4294901760
    %v434 = vsub.f32 %v107, %v433
    %v435 = vand.u32 %v434, 4294901760
    %v436 = vsub.f32 %v434, %v435
    %v437 = vand.u32 %v436, 4294901760
    %438 = vmatpush1.msra.mxu0 %v437
    %439 = vmatprep.subr.mxu0 0.0
    %v440 = vand.u32 %v108, 4294901760
    %v441 = vsub.f32 %v108, %v440
    %v442 = vand.u32 %v441, 4294901760
    %v443 = vsub.f32 %v441, %v442
    %v444 = vand.u32 %v443, 4294901760
    %445 = vmatpush1.msra.mxu0 %v444
    %446 = vmatprep.subr.mxu0 0.0
    %v447 = vand.u32 %v109, 4294901760
    %v448 = vsub.f32 %v109, %v447
    %v449 = vand.u32 %v448, 4294901760
    %v450 = vsub.f32 %v448, %v449
    %v451 = vand.u32 %v450, 4294901760
    %452 = vmatpush1.msra.mxu0 %v451
    %v453 = vand.u32 %v77, 4294901760
    %454 = vmatprep.mubr.f32.mxu0 %v453
    %v455 = vand.u32 %v76, 4294901760
    %456 = vmatmul.mubr.f32.gmra.mrb[0].mxu0 %v455
    %v457 = vpop.f32.mrb[0].mxu0
    %v458 = vadd.f32 %v226, %v457
    %v459 = vpop.f32.mrb[0].mxu0
    %460 = vdwg.mxu0
    %461 = vmatprep.subr.mxu0 0.0
    %v462 = vand.u32 %v78, 4294901760
    %v463 = vsub.f32 %v78, %v462
    %464 = vmatpush1.msra.mxu0 %v463
    %465 = vmatprep.subr.mxu0 0.0
    %v466 = vand.u32 %v79, 4294901760
    %v467 = vsub.f32 %v79, %v466
    %468 = vmatpush1.msra.mxu0 %v467
    %469 = vmatprep.subr.mxu0 0.0
    %v470 = vand.u32 %v80, 4294901760
    %v471 = vsub.f32 %v80, %v470
    %472 = vmatpush1.msra.mxu0 %v471
    %473 = vmatprep.subr.mxu0 0.0
    %v474 = vand.u32 %v81, 4294901760
    %v475 = vsub.f32 %v81, %v474
    %476 = vmatpush1.msra.mxu0 %v475
    %477 = vmatprep.subr.mxu0 0.0
    %v478 = vand.u32 %v82, 4294901760
    %v479 = vsub.f32 %v82, %v478
    %480 = vmatpush1.msra.mxu0 %v479
    %481 = vmatprep.subr.mxu0 0.0
    %v482 = vand.u32 %v83, 4294901760
    %v483 = vsub.f32 %v83, %v482
    %484 = vmatpush1.msra.mxu0 %v483
    %485 = vmatprep.subr.mxu0 0.0
    %v486 = vand.u32 %v84, 4294901760
    %v487 = vsub.f32 %v84, %v486
    %488 = vmatpush1.msra.mxu0 %v487
    %489 = vmatprep.subr.mxu0 0.0
    %v490 = vand.u32 %v85, 4294901760
    %v491 = vsub.f32 %v85, %v490
    %492 = vmatpush1.msra.mxu0 %v491
    %493 = vmatprep.subr.mxu0 0.0
    %v494 = vand.u32 %v86, 4294901760
    %v495 = vsub.f32 %v86, %v494
    %496 = vmatpush1.msra.mxu0 %v495
    %497 = vmatprep.subr.mxu0 0.0
    %v498 = vand.u32 %v87, 4294901760
    %v499 = vsub.f32 %v87, %v498
    %500 = vmatpush1.msra.mxu0 %v499
    %501 = vmatprep.subr.mxu0 0.0
    %v502 = vand.u32 %v88, 4294901760
    %v503 = vsub.f32 %v88, %v502
    %504 = vmatpush1.msra.mxu0 %v503
    %505 = vmatprep.subr.mxu0 0.0
    %v506 = vand.u32 %v89, 4294901760
    %v507 = vsub.f32 %v89, %v506
    %508 = vmatpush1.msra.mxu0 %v507
    %509 = vmatprep.subr.mxu0 0.0
    %v510 = vand.u32 %v90, 4294901760
    %v511 = vsub.f32 %v90, %v510
    %512 = vmatpush1.msra.mxu0 %v511
    %513 = vmatprep.subr.mxu0 0.0
    %v514 = vand.u32 %v91, 4294901760
    %v515 = vsub.f32 %v91, %v514
    %516 = vmatpush1.msra.mxu0 %v515
    %517 = vmatprep.subr.mxu0 0.0
    %v518 = vand.u32 %v92, 4294901760
    %v519 = vsub.f32 %v92, %v518
    %520 = vmatpush1.msra.mxu0 %v519
    %521 = vmatprep.subr.mxu0 0.0
    %v522 = vand.u32 %v93, 4294901760
    %v523 = vsub.f32 %v93, %v522
    %524 = vmatpush1.msra.mxu0 %v523
    %525 = vmatprep.subr.mxu0 0.0
    %v526 = vand.u32 %v94, 4294901760
    %v527 = vsub.f32 %v94, %v526
    %528 = vmatpush1.msra.mxu0 %v527
    %529 = vmatprep.subr.mxu0 0.0
    %v530 = vand.u32 %v95, 4294901760
    %v531 = vsub.f32 %v95, %v530
    %532 = vmatpush1.msra.mxu0 %v531
    %533 = vmatprep.subr.mxu0 0.0
    %v534 = vand.u32 %v96, 4294901760
    %v535 = vsub.f32 %v96, %v534
    %536 = vmatpush1.msra.mxu0 %v535
    %537 = vmatprep.subr.mxu0 0.0
    %v538 = vand.u32 %v97, 4294901760
    %v539 = vsub.f32 %v97, %v538
    %540 = vmatpush1.msra.mxu0 %v539
    %541 = vmatprep.subr.mxu0 0.0
    %v542 = vand.u32 %v98, 4294901760
    %v543 = vsub.f32 %v98, %v542
    %544 = vmatpush1.msra.mxu0 %v543
    %545 = vmatprep.subr.mxu0 0.0
    %v546 = vand.u32 %v99, 4294901760
    %v547 = vsub.f32 %v99, %v546
    %548 = vmatpush1.msra.mxu0 %v547
    %549 = vmatprep.subr.mxu0 0.0
    %v550 = vand.u32 %v100, 4294901760
    %v551 = vsub.f32 %v100, %v550
    %552 = vmatpush1.msra.mxu0 %v551
    %553 = vmatprep.subr.mxu0 0.0
    %v554 = vand.u32 %v101, 4294901760
    %v555 = vsub.f32 %v101, %v554
    %556 = vmatpush1.msra.mxu0 %v555
    %557 = vmatprep.subr.mxu0 0.0
    %v558 = vand.u32 %v102, 4294901760
    %v559 = vsub.f32 %v102, %v558
    %560 = vmatpush1.msra.mxu0 %v559
    %561 = vmatprep.subr.mxu0 0.0
    %v562 = vand.u32 %v103, 4294901760
    %v563 = vsub.f32 %v103, %v562
    %564 = vmatpush1.msra.mxu0 %v563
    %565 = vmatprep.subr.mxu0 0.0
    %v566 = vand.u32 %v104, 4294901760
    %v567 = vsub.f32 %v104, %v566
    %568 = vmatpush1.msra.mxu0 %v567
    %569 = vmatprep.subr.mxu0 0.0
    %v570 = vand.u32 %v105, 4294901760
    %v571 = vsub.f32 %v105, %v570
    %572 = vmatpush1.msra.mxu0 %v571
    %573 = vmatprep.subr.mxu0 0.0
    %v574 = vand.u32 %v106, 4294901760
    %v575 = vsub.f32 %v106, %v574
    %576 = vmatpush1.msra.mxu0 %v575
    %577 = vmatprep.subr.mxu0 0.0
    %v578 = vand.u32 %v107, 4294901760
    %v579 = vsub.f32 %v107, %v578
    %580 = vmatpush1.msra.mxu0 %v579
    %581 = vmatprep.subr.mxu0 0.0
    %v582 = vand.u32 %v108, 4294901760
    %v583 = vsub.f32 %v108, %v582
    %584 = vmatpush1.msra.mxu0 %v583
    %585 = vmatprep.subr.mxu0 0.0
    %v586 = vand.u32 %v109, 4294901760
    %v587 = vsub.f32 %v109, %v586
    %588 = vmatpush1.msra.mxu0 %v587
    %v589 = vand.u32 %v77, 4294901760
    %v590 = vsub.f32 %v77, %v589
    %591 = vmatprep.mubr.f32.mxu0 %v590
    %v592 = vand.u32 %v76, 4294901760
    %v593 = vsub.f32 %v76, %v592
    %594 = vmatmul.mubr.f32.gmra.mrb[0].mxu0 %v593
    %v595 = vpop.f32.mrb[0].mxu0
    %v596 = vadd.f32 %v458, %v595
    %v597 = vpop.f32.mrb[0].mxu0
    %598 = vdwg.mxu0
    %599 = vmatprep.subr.mxu0 0.0
    %v600 = vand.u32 %v78, 4294901760
    %601 = vmatpush1.msra.mxu0 %v600
    %602 = vmatprep.subr.mxu0 0.0
    %v603 = vand.u32 %v79, 4294901760
    %604 = vmatpush1.msra.mxu0 %v603
    %605 = vmatprep.subr.mxu0 0.0
    %v606 = vand.u32 %v80, 4294901760
    %607 = vmatpush1.msra.mxu0 %v606
    %608 = vmatprep.subr.mxu0 0.0
    %v609 = vand.u32 %v81, 4294901760
    %610 = vmatpush1.msra.mxu0 %v609
    %611 = vmatprep.subr.mxu0 0.0
    %v612 = vand.u32 %v82, 4294901760
    %613 = vmatpush1.msra.mxu0 %v612
    %614 = vmatprep.subr.mxu0 0.0
    %v615 = vand.u32 %v83, 4294901760
    %616 = vmatpush1.msra.mxu0 %v615
    %617 = vmatprep.subr.mxu0 0.0
    %v618 = vand.u32 %v84, 4294901760
    %619 = vmatpush1.msra.mxu0 %v618
    %620 = vmatprep.subr.mxu0 0.0
    %v621 = vand.u32 %v85, 4294901760
    %622 = vmatpush1.msra.mxu0 %v621
    %623 = vmatprep.subr.mxu0 0.0
    %v624 = vand.u32 %v86, 4294901760
    %625 = vmatpush1.msra.mxu0 %v624
    %626 = vmatprep.subr.mxu0 0.0
    %v627 = vand.u32 %v87, 4294901760
    %628 = vmatpush1.msra.mxu0 %v627
    %629 = vmatprep.subr.mxu0 0.0
    %v630 = vand.u32 %v88, 4294901760
    %631 = vmatpush1.msra.mxu0 %v630
    %632 = vmatprep.subr.mxu0 0.0
    %v633 = vand.u32 %v89, 4294901760
    %634 = vmatpush1.msra.mxu0 %v633
    %635 = vmatprep.subr.mxu0 0.0
    %v636 = vand.u32 %v90, 4294901760
    %637 = vmatpush1.msra.mxu0 %v636
    %638 = vmatprep.subr.mxu0 0.0
    %v639 = vand.u32 %v91, 4294901760
    %640 = vmatpush1.msra.mxu0 %v639
    %641 = vmatprep.subr.mxu0 0.0
    %v642 = vand.u32 %v92, 4294901760
    %643 = vmatpush1.msra.mxu0 %v642
    %644 = vmatprep.subr.mxu0 0.0
    %v645 = vand.u32 %v93, 4294901760
    %646 = vmatpush1.msra.mxu0 %v645
    %647 = vmatprep.subr.mxu0 0.0
    %v648 = vand.u32 %v94, 4294901760
    %649 = vmatpush1.msra.mxu0 %v648
    %650 = vmatprep.subr.mxu0 0.0
    %v651 = vand.u32 %v95, 4294901760
    %652 = vmatpush1.msra.mxu0 %v651
    %653 = vmatprep.subr.mxu0 0.0
    %v654 = vand.u32 %v96, 4294901760
    %655 = vmatpush1.msra.mxu0 %v654
    %656 = vmatprep.subr.mxu0 0.0
    %v657 = vand.u32 %v97, 4294901760
    %658 = vmatpush1.msra.mxu0 %v657
    %659 = vmatprep.subr.mxu0 0.0
    %v660 = vand.u32 %v98, 4294901760
    %661 = vmatpush1.msra.mxu0 %v660
    %662 = vmatprep.subr.mxu0 0.0
    %v663 = vand.u32 %v99, 4294901760
    %664 = vmatpush1.msra.mxu0 %v663
    %665 = vmatprep.subr.mxu0 0.0
    %v666 = vand.u32 %v100, 4294901760
    %667 = vmatpush1.msra.mxu0 %v666
    %668 = vmatprep.subr.mxu0 0.0
    %v669 = vand.u32 %v101, 4294901760
    %670 = vmatpush1.msra.mxu0 %v669
    %671 = vmatprep.subr.mxu0 0.0
    %v672 = vand.u32 %v102, 4294901760
    %673 = vmatpush1.msra.mxu0 %v672
    %674 = vmatprep.subr.mxu0 0.0
    %v675 = vand.u32 %v103, 4294901760
    %676 = vmatpush1.msra.mxu0 %v675
    %677 = vmatprep.subr.mxu0 0.0
    %v678 = vand.u32 %v104, 4294901760
    %679 = vmatpush1.msra.mxu0 %v678
    %680 = vmatprep.subr.mxu0 0.0
    %v681 = vand.u32 %v105, 4294901760
    %682 = vmatpush1.msra.mxu0 %v681
    %683 = vmatprep.subr.mxu0 0.0
    %v684 = vand.u32 %v106, 4294901760
    %685 = vmatpush1.msra.mxu0 %v684
    %686 = vmatprep.subr.mxu0 0.0
    %v687 = vand.u32 %v107, 4294901760
    %688 = vmatpush1.msra.mxu0 %v687
    %689 = vmatprep.subr.mxu0 0.0
    %v690 = vand.u32 %v108, 4294901760
    %691 = vmatpush1.msra.mxu0 %v690
    %692 = vmatprep.subr.mxu0 0.0
    %v693 = vand.u32 %v109, 4294901760
    %694 = vmatpush1.msra.mxu0 %v693
    %v695 = vand.u32 %v77, 4294901760
    %v696 = vsub.f32 %v77, %v695
    %v697 = vand.u32 %v696, 4294901760
    %698 = vmatprep.mubr.f32.mxu0 %v697
    %v699 = vand.u32 %v76, 4294901760
    %v700 = vsub.f32 %v76, %v699
    %v701 = vand.u32 %v700, 4294901760
    %702 = vmatmul.mubr.f32.gmra.mrb[0].mxu0 %v701
    %v703 = vpop.f32.mrb[0].mxu0
    %v704 = vadd.f32 %v596, %v703
    %v705 = vpop.f32.mrb[0].mxu0
    %706 = vdwg.mxu0
    %707 = vmatprep.subr.mxu0 0.0
    %v708 = vand.u32 %v78, 4294901760
    %v709 = vsub.f32 %v78, %v708
    %v710 = vand.u32 %v709, 4294901760
    %711 = vmatpush1.msra.mxu0 %v710
    %712 = vmatprep.subr.mxu0 0.0
    %v713 = vand.u32 %v79, 4294901760
    %v714 = vsub.f32 %v79, %v713
    %v715 = vand.u32 %v714, 4294901760
    %716 = vmatpush1.msra.mxu0 %v715
    %717 = vmatprep.subr.mxu0 0.0
    %v718 = vand.u32 %v80, 4294901760
    %v719 = vsub.f32 %v80, %v718
    %v720 = vand.u32 %v719, 4294901760
    %721 = vmatpush1.msra.mxu0 %v720
    %722 = vmatprep.subr.mxu0 0.0
    %v723 = vand.u32 %v81, 4294901760
    %v724 = vsub.f32 %v81, %v723
    %v725 = vand.u32 %v724, 4294901760
    %726 = vmatpush1.msra.mxu0 %v725
    %727 = vmatprep.subr.mxu0 0.0
    %v728 = vand.u32 %v82, 4294901760
    %v729 = vsub.f32 %v82, %v728
    %v730 = vand.u32 %v729, 4294901760
    %731 = vmatpush1.msra.mxu0 %v730
    %732 = vmatprep.subr.mxu0 0.0
    %v733 = vand.u32 %v83, 4294901760
    %v734 = vsub.f32 %v83, %v733
    %v735 = vand.u32 %v734, 4294901760
    %736 = vmatpush1.msra.mxu0 %v735
    %737 = vmatprep.subr.mxu0 0.0
    %v738 = vand.u32 %v84, 4294901760
    %v739 = vsub.f32 %v84, %v738
    %v740 = vand.u32 %v739, 4294901760
    %741 = vmatpush1.msra.mxu0 %v740
    %742 = vmatprep.subr.mxu0 0.0
    %v743 = vand.u32 %v85, 4294901760
    %v744 = vsub.f32 %v85, %v743
    %v745 = vand.u32 %v744, 4294901760
    %746 = vmatpush1.msra.mxu0 %v745
    %747 = vmatprep.subr.mxu0 0.0
    %v748 = vand.u32 %v86, 4294901760
    %v749 = vsub.f32 %v86, %v748
    %v750 = vand.u32 %v749, 4294901760
    %751 = vmatpush1.msra.mxu0 %v750
    %752 = vmatprep.subr.mxu0 0.0
    %v753 = vand.u32 %v87, 4294901760
    %v754 = vsub.f32 %v87, %v753
    %v755 = vand.u32 %v754, 4294901760
    %756 = vmatpush1.msra.mxu0 %v755
    %757 = vmatprep.subr.mxu0 0.0
    %v758 = vand.u32 %v88, 4294901760
    %v759 = vsub.f32 %v88, %v758
    %v760 = vand.u32 %v759, 4294901760
    %761 = vmatpush1.msra.mxu0 %v760
    %762 = vmatprep.subr.mxu0 0.0
    %v763 = vand.u32 %v89, 4294901760
    %v764 = vsub.f32 %v89, %v763
    %v765 = vand.u32 %v764, 4294901760
    %766 = vmatpush1.msra.mxu0 %v765
    %767 = vmatprep.subr.mxu0 0.0
    %v768 = vand.u32 %v90, 4294901760
    %v769 = vsub.f32 %v90, %v768
    %v770 = vand.u32 %v769, 4294901760
    %771 = vmatpush1.msra.mxu0 %v770
    %772 = vmatprep.subr.mxu0 0.0
    %v773 = vand.u32 %v91, 4294901760
    %v774 = vsub.f32 %v91, %v773
    %v775 = vand.u32 %v774, 4294901760
    %776 = vmatpush1.msra.mxu0 %v775
    %777 = vmatprep.subr.mxu0 0.0
    %v778 = vand.u32 %v92, 4294901760
    %v779 = vsub.f32 %v92, %v778
    %v780 = vand.u32 %v779, 4294901760
    %781 = vmatpush1.msra.mxu0 %v780
    %782 = vmatprep.subr.mxu0 0.0
    %v783 = vand.u32 %v93, 4294901760
    %v784 = vsub.f32 %v93, %v783
    %v785 = vand.u32 %v784, 4294901760
    %786 = vmatpush1.msra.mxu0 %v785
    %787 = vmatprep.subr.mxu0 0.0
    %v788 = vand.u32 %v94, 4294901760
    %v789 = vsub.f32 %v94, %v788
    %v790 = vand.u32 %v789, 4294901760
    %791 = vmatpush1.msra.mxu0 %v790
    %792 = vmatprep.subr.mxu0 0.0
    %v793 = vand.u32 %v95, 4294901760
    %v794 = vsub.f32 %v95, %v793
    %v795 = vand.u32 %v794, 4294901760
    %796 = vmatpush1.msra.mxu0 %v795
    %797 = vmatprep.subr.mxu0 0.0
    %v798 = vand.u32 %v96, 4294901760
    %v799 = vsub.f32 %v96, %v798
    %v800 = vand.u32 %v799, 4294901760
    %801 = vmatpush1.msra.mxu0 %v800
    %802 = vmatprep.subr.mxu0 0.0
    %v803 = vand.u32 %v97, 4294901760
    %v804 = vsub.f32 %v97, %v803
    %v805 = vand.u32 %v804, 4294901760
    %806 = vmatpush1.msra.mxu0 %v805
    %807 = vmatprep.subr.mxu0 0.0
    %v808 = vand.u32 %v98, 4294901760
    %v809 = vsub.f32 %v98, %v808
    %v810 = vand.u32 %v809, 4294901760
    %811 = vmatpush1.msra.mxu0 %v810
    %812 = vmatprep.subr.mxu0 0.0
    %v813 = vand.u32 %v99, 4294901760
    %v814 = vsub.f32 %v99, %v813
    %v815 = vand.u32 %v814, 4294901760
    %816 = vmatpush1.msra.mxu0 %v815
    %817 = vmatprep.subr.mxu0 0.0
    %v818 = vand.u32 %v100, 4294901760
    %v819 = vsub.f32 %v100, %v818
    %v820 = vand.u32 %v819, 4294901760
    %821 = vmatpush1.msra.mxu0 %v820
    %822 = vmatprep.subr.mxu0 0.0
    %v823 = vand.u32 %v101, 4294901760
    %v824 = vsub.f32 %v101, %v823
    %v825 = vand.u32 %v824, 4294901760
    %826 = vmatpush1.msra.mxu0 %v825
    %827 = vmatprep.subr.mxu0 0.0
    %v828 = vand.u32 %v102, 4294901760
    %v829 = vsub.f32 %v102, %v828
    %v830 = vand.u32 %v829, 4294901760
    %831 = vmatpush1.msra.mxu0 %v830
    %832 = vmatprep.subr.mxu0 0.0
    %v833 = vand.u32 %v103, 4294901760
    %v834 = vsub.f32 %v103, %v833
    %v835 = vand.u32 %v834, 4294901760
    %836 = vmatpush1.msra.mxu0 %v835
    %837 = vmatprep.subr.mxu0 0.0
    %v838 = vand.u32 %v104, 4294901760
    %v839 = vsub.f32 %v104, %v838
    %v840 = vand.u32 %v839, 4294901760
    %841 = vmatpush1.msra.mxu0 %v840
    %842 = vmatprep.subr.mxu0 0.0
    %v843 = vand.u32 %v105, 4294901760
    %v844 = vsub.f32 %v105, %v843
    %v845 = vand.u32 %v844, 4294901760
    %846 = vmatpush1.msra.mxu0 %v845
    %847 = vmatprep.subr.mxu0 0.0
    %v848 = vand.u32 %v106, 4294901760
    %v849 = vsub.f32 %v106, %v848
    %v850 = vand.u32 %v849, 4294901760
    %851 = vmatpush1.msra.mxu0 %v850
    %852 = vmatprep.subr.mxu0 0.0
    %v853 = vand.u32 %v107, 4294901760
    %v854 = vsub.f32 %v107, %v853
    %v855 = vand.u32 %v854, 4294901760
    %856 = vmatpush1.msra.mxu0 %v855
    %857 = vmatprep.subr.mxu0 0.0
    %v858 = vand.u32 %v108, 4294901760
    %v859 = vsub.f32 %v108, %v858
    %v860 = vand.u32 %v859, 4294901760
    %861 = vmatpush1.msra.mxu0 %v860
    %862 = vmatprep.subr.mxu0 0.0
    %v863 = vand.u32 %v109, 4294901760
    %v864 = vsub.f32 %v109, %v863
    %v865 = vand.u32 %v864, 4294901760
    %866 = vmatpush1.msra.mxu0 %v865
    %v867 = vand.u32 %v77, 4294901760
    %868 = vmatprep.mubr.f32.mxu0 %v867
    %v869 = vand.u32 %v76, 4294901760
    %870 = vmatmul.mubr.f32.gmra.mrb[0].mxu0 %v869
    %v871 = vpop.f32.mrb[0].mxu0
    %v872 = vadd.f32 %v704, %v871
    %v873 = vpop.f32.mrb[0].mxu0
    %874 = vdwg.mxu0
    %875 = vmatprep.subr.mxu0 0.0
    %v876 = vand.u32 %v78, 4294901760
    %877 = vmatpush1.msra.mxu0 %v876
    %878 = vmatprep.subr.mxu0 0.0
    %v879 = vand.u32 %v79, 4294901760
    %880 = vmatpush1.msra.mxu0 %v879
    %881 = vmatprep.subr.mxu0 0.0
    %v882 = vand.u32 %v80, 4294901760
    %883 = vmatpush1.msra.mxu0 %v882
    %884 = vmatprep.subr.mxu0 0.0
    %v885 = vand.u32 %v81, 4294901760
    %886 = vmatpush1.msra.mxu0 %v885
    %887 = vmatprep.subr.mxu0 0.0
    %v888 = vand.u32 %v82, 4294901760
    %889 = vmatpush1.msra.mxu0 %v888
    %890 = vmatprep.subr.mxu0 0.0
    %v891 = vand.u32 %v83, 4294901760
    %892 = vmatpush1.msra.mxu0 %v891
    %893 = vmatprep.subr.mxu0 0.0
    %v894 = vand.u32 %v84, 4294901760
    %895 = vmatpush1.msra.mxu0 %v894
    %896 = vmatprep.subr.mxu0 0.0
    %v897 = vand.u32 %v85, 4294901760
    %898 = vmatpush1.msra.mxu0 %v897
    %899 = vmatprep.subr.mxu0 0.0
    %v900 = vand.u32 %v86, 4294901760
    %901 = vmatpush1.msra.mxu0 %v900
    %902 = vmatprep.subr.mxu0 0.0
    %v903 = vand.u32 %v87, 4294901760
    %904 = vmatpush1.msra.mxu0 %v903
    %905 = vmatprep.subr.mxu0 0.0
    %v906 = vand.u32 %v88, 4294901760
    %907 = vmatpush1.msra.mxu0 %v906
    %908 = vmatprep.subr.mxu0 0.0
    %v909 = vand.u32 %v89, 4294901760
    %910 = vmatpush1.msra.mxu0 %v909
    %911 = vmatprep.subr.mxu0 0.0
    %v912 = vand.u32 %v90, 4294901760
    %913 = vmatpush1.msra.mxu0 %v912
    %914 = vmatprep.subr.mxu0 0.0
    %v915 = vand.u32 %v91, 4294901760
    %916 = vmatpush1.msra.mxu0 %v915
    %917 = vmatprep.subr.mxu0 0.0
    %v918 = vand.u32 %v92, 4294901760
    %919 = vmatpush1.msra.mxu0 %v918
    %920 = vmatprep.subr.mxu0 0.0
    %v921 = vand.u32 %v93, 4294901760
    %922 = vmatpush1.msra.mxu0 %v921
    %923 = vmatprep.subr.mxu0 0.0
    %v924 = vand.u32 %v94, 4294901760
    %925 = vmatpush1.msra.mxu0 %v924
    %926 = vmatprep.subr.mxu0 0.0
    %v927 = vand.u32 %v95, 4294901760
    %928 = vmatpush1.msra.mxu0 %v927
    %929 = vmatprep.subr.mxu0 0.0
    %v930 = vand.u32 %v96, 4294901760
    %931 = vmatpush1.msra.mxu0 %v930
    %932 = vmatprep.subr.mxu0 0.0
    %v933 = vand.u32 %v97, 4294901760
    %934 = vmatpush1.msra.mxu0 %v933
    %935 = vmatprep.subr.mxu0 0.0
    %v936 = vand.u32 %v98, 4294901760
    %937 = vmatpush1.msra.mxu0 %v936
    %938 = vmatprep.subr.mxu0 0.0
    %v939 = vand.u32 %v99, 4294901760
    %940 = vmatpush1.msra.mxu0 %v939
    %941 = vmatprep.subr.mxu0 0.0
    %v942 = vand.u32 %v100, 4294901760
    %943 = vmatpush1.msra.mxu0 %v942
    %944 = vmatprep.subr.mxu0 0.0
    %v945 = vand.u32 %v101, 4294901760
    %946 = vmatpush1.msra.mxu0 %v945
    %947 = vmatprep.subr.mxu0 0.0
    %v948 = vand.u32 %v102, 4294901760
    %949 = vmatpush1.msra.mxu0 %v948
    %950 = vmatprep.subr.mxu0 0.0
    %v951 = vand.u32 %v103, 4294901760
    %952 = vmatpush1.msra.mxu0 %v951
    %953 = vmatprep.subr.mxu0 0.0
    %v954 = vand.u32 %v104, 4294901760
    %955 = vmatpush1.msra.mxu0 %v954
    %956 = vmatprep.subr.mxu0 0.0
    %v957 = vand.u32 %v105, 4294901760
    %958 = vmatpush1.msra.mxu0 %v957
    %959 = vmatprep.subr.mxu0 0.0
    %v960 = vand.u32 %v106, 4294901760
    %961 = vmatpush1.msra.mxu0 %v960
    %962 = vmatprep.subr.mxu0 0.0
    %v963 = vand.u32 %v107, 4294901760
    %964 = vmatpush1.msra.mxu0 %v963
    %965 = vmatprep.subr.mxu0 0.0
    %v966 = vand.u32 %v108, 4294901760
    %967 = vmatpush1.msra.mxu0 %v966
    %968 = vmatprep.subr.mxu0 0.0
    %v969 = vand.u32 %v109, 4294901760
    %970 = vmatpush1.msra.mxu0 %v969
    %v971 = vand.u32 %v77, 4294901760
    %972 = vmatprep.mubr.f32.mxu0 %v971
    %v973 = vand.u32 %v76, 4294901760
    %974 = vmatmul.mubr.f32.gmra.mrb[0].mxu0 %v973
    %v975 = vpop.f32.mrb[0].mxu0
    %v976 = vadd.f32 %v872, %v975
    %v977 = vpop.f32.mrb[0].mxu0
    %978 = vdwg.mxu0
    %979 = vst [vmem:[%s5] sm:$0xff] %v976
    // Predicated region
    $region34: #{attention_unit_forward.1} parent=1 // pred_check
      _
    $region35: #{attention_unit_forward.1} parent=1 // pred_check_branch
      %981 = sbr.rel (0) target = $region37
    $region36: #{attention_unit_forward.1} parent=1 // pred_region
      _
    $region37: #{attention_unit_forward.1} parent=1 // pred_fallthru
      _
    // Predicated region
    $region38: #{attention_unit_forward.1} parent=1 // pred_check
      _
    $region39: #{attention_unit_forward.1} parent=1 // pred_check_branch
      %983 = sbr.rel (0) target = $region41
    $region40: #{attention_unit_forward.1} parent=1 // pred_region
      _
    $region41: #{attention_unit_forward.1} parent=1 // pred_fallthru
      _
    %984 = vsyncpa [#allocation3], 1
    %985 = vsyncpa [#allocation5], 1

</llo_original>
